<compile_context>
chip_gen: v7x
topology: tpu7x:2x2x1
jax: 0.10.0
libtpu: 0.0.40
codegen_flags: <defaults>
</compile_context>

<pallas_src>
import functools

import jax
import jax.numpy as jnp
from jax.experimental import pallas as pl
from jax.experimental.pallas import tpu as pltpu

# Model hyperparameters (mirroring the PyTorch module)
HIDDEN_SIZE = 64
INPUT_SIZE = 4
NUM_LAYERS = 1  # single-layer recurrence implemented below
PREDICT_SEQUENCE_LENGTH = 10
OUTPUT_SIZE = 4 * PREDICT_SEQUENCE_LENGTH

HP = 128  # hidden size padded to a full vreg lane width


def _rnn_predictor_kernel(x_ref, wih_ref, whh_ref, b_ref, wfc_ref, bfc_ref,
                          o_ref, *, batch, steps):
    """Whole forward pass in one kernel invocation (shapes are tiny).

    x_ref   : (B*T, I)   batch-major flattened input (reshaped in the wrapper)
    wih_ref : (I, HP)    W_ih^T, zero-padded to 128 lanes           (f32)
    whh_ref : (HP, HP)   W_hh^T, zero-padded                        (bf16)
    b_ref   : (1, HP)    b_ih + b_hh, zero-padded                   (f32)
    wfc_ref : (HP, O)    W_fc^T, zero-padded rows                   (f32)
    bfc_ref : (1, O)     b_fc                                       (f32)
    o_ref   : (B, O)     output                                     (f32)
    """
    hp = whh_ref.shape[0]

    # ---- Hoisted input projection: ONE matmul, combined bias folded in -----
    # xw[b*T + t, :] = x[b, t, :] @ W_ih^T + (b_ih + b_hh)
    xw = (
        jnp.dot(x_ref[...], wih_ref[...], preferred_element_type=jnp.float32)
        + b_ref[...]
    )
    # Layout-preserving leading-dim split so each step reads one sublane/batch.
    xw = xw.reshape(batch, steps, hp)

    whh_bf16 = whh_ref[...]  # already bf16 (cast once in prepare_params)

    # ---- Fully-unrolled Elman recurrence (T static, h0 = 0) ----------------
    # t = 0: h0 == 0 so the h @ W_hh term vanishes.  Activations stay f32;
    # only the MXU operands of the recurrent matmul are bf16.
    h = jnp.tanh(xw[:, 0, :])
    for t in range(1, steps):
        rec = jnp.dot(h.astype(jnp.bfloat16), whh_bf16,
                      preferred_element_type=jnp.float32)
        h = jnp.tanh(xw[:, t, :] + rec)

    # ---- fc on the last hidden state (x[:, -1, :] in the PyTorch code) -----
    # Padded hidden lanes are exactly zero and wfc's padded rows are zero, so
    # the O=40 result matches the unpadded model.  Masked vst on 40 lanes is
    # negligible at this size.
    out = (
        jnp.dot(h, wfc_ref[...], preferred_element_type=jnp.float32)
        + bfc_ref[...]
    )
    o_ref[...] = out.astype(o_ref.dtype)


def prepare_params(w_ih, w_hh, b_ih, b_hh, w_fc, b_fc):
    """One-time parameter preprocessing (NOT part of the per-forward path).

    Transposes, combines the two RNN biases, zero-pads the hidden dim to 128
    lanes and casts W_hh (the serial-chain matmul operand) to bf16.
    """
    w_ih = jnp.asarray(w_ih, jnp.float32)   # (H, I)
    w_hh = jnp.asarray(w_hh, jnp.float32)   # (H, H)
    w_fc = jnp.asarray(w_fc, jnp.float32)   # (O, H)
    H, I = w_ih.shape
    O = w_fc.shape[0]

    wih_t = jnp.zeros((I, HP), jnp.float32).at[:, :H].set(w_ih.T)        # (I, HP)
    whh_t = (jnp.zeros((HP, HP), jnp.float32)
             .at[:H, :H].set(w_hh.T)
             .astype(jnp.bfloat16))                                      # (HP, HP) bf16
    b = (jnp.zeros((1, HP), jnp.float32)
         .at[0, :H].set(jnp.asarray(b_ih, jnp.float32)
                        + jnp.asarray(b_hh, jnp.float32)))               # (1, HP)
    wfc_t = jnp.zeros((HP, O), jnp.float32).at[:H, :].set(w_fc.T)        # (HP, O)
    bfc = jnp.asarray(b_fc, jnp.float32).reshape(1, O)                   # (1, O)
    return wih_t, whh_t, b, wfc_t, bfc


@jax.jit
def rnn_predictor(x, wih_t, whh_t, b, wfc_t, bfc):
    """x: (B, T, I) float32 batch-first. Params from prepare_params().

    Works for any B; larger B (>=8 sublanes, up to 128/256) amortizes the
    fixed launch/serial-chain cost almost linearly.
    """
    B, T, I = x.shape
    O = wfc_t.shape[1]
    # Leading-dim collapse is layout-preserving: no extra HLO copy.
    x2d = x.reshape(B * T, I)
    vmem = pl.BlockSpec(memory_space=pltpu.MemorySpace.VMEM)
    kernel = functools.partial(_rnn_predictor_kernel, batch=B, steps=T)
    return pl.pallas_call(
        kernel,
        out_shape=jax.ShapeDtypeStruct((B, O), jnp.float32),
        in_specs=[vmem] * 6,
        out_specs=vmem,
    )(x2d, wih_t, whh_t, b, wfc_t, bfc)


def _reference_forward(x, w_ih, w_hh, b_ih, b_hh, w_fc, b_fc):
    """Pure-JAX f32 reference matching torch.nn.RNN(tanh) + Linear semantics."""
    B, T, _ = x.shape
    H = w_ih.shape[0]
    h = jnp.zeros((B, H), dtype=jnp.float32)
    for t in range(T):
        h = jnp.tanh(x[:, t, :] @ w_ih.T + b_ih + h @ w_hh.T + b_hh)
    return h @ w_fc.T + b_fc


if __name__ == "__main__":
    key = jax.random.PRNGKey(0)
    k_x, k1, k2, k3, k4, k5, k6 = jax.random.split(key, 7)

    B, T = 2, 8  # small batch and sequence length (harness-sized demo)

    # Deterministic parameter init (PyTorch-style uniform(-1/sqrt(H), 1/sqrt(H)))
    bound = 1.0 / jnp.sqrt(jnp.float32(HIDDEN_SIZE))
    w_ih = jax.random.uniform(k1, (HIDDEN_SIZE, INPUT_SIZE), jnp.float32, -bound, bound)
    w_hh = jax.random.uniform(k2, (HIDDEN_SIZE, HIDDEN_SIZE), jnp.float32, -bound, bound)
    b_ih = jax.random.uniform(k3, (HIDDEN_SIZE,), jnp.float32, -bound, bound)
    b_hh = jax.random.uniform(k4, (HIDDEN_SIZE,), jnp.float32, -bound, bound)
    w_fc = jax.random.uniform(k5, (OUTPUT_SIZE, HIDDEN_SIZE), jnp.float32, -bound, bound)
    b_fc = jax.random.uniform(k6, (OUTPUT_SIZE,), jnp.float32, -bound, bound)

    x = jax.random.normal(k_x, (B, T, INPUT_SIZE), dtype=jnp.float32)

    # One-time parameter prep (transpose / pad / bias-combine / bf16 cast),
    # outside the per-call path.
    params = prepare_params(w_ih, w_hh, b_ih, b_hh, w_fc, b_fc)
    params = jax.tree_util.tree_map(jax.block_until_ready, params)

    out = rnn_predictor(x, *params)
    out = jax.block_until_ready(out)

    ref = _reference_forward(x, w_ih, w_hh, b_ih, b_hh, w_fc, b_fc)
    assert out.shape == (B, OUTPUT_SIZE)
    # Tolerance loosened (bf16 recurrent-matmul operands compound over T steps).
    assert jnp.allclose(out, ref, atol=2e-2, rtol=2e-2), "mismatch vs reference"

    print("KERNEL_OK")
</pallas_src>

<mosaic_0001>
module attributes {stable_mosaic.version = 11 : i64} {
  func.func @_rnn_predictor_kernel(%arg0: memref<16x4xf32, #tpu.memory_space<vmem>>, %arg1: memref<4x128xf32, #tpu.memory_space<vmem>>, %arg2: memref<128x128xbf16, #tpu.memory_space<vmem>>, %arg3: memref<1x128xf32, #tpu.memory_space<vmem>>, %arg4: memref<128x40xf32, #tpu.memory_space<vmem>>, %arg5: memref<1x40xf32, #tpu.memory_space<vmem>>, %arg6: memref<2x40xf32, #tpu.memory_space<vmem>>) attributes {dimension_semantics = [], scalar_prefetch = 0 : i64, scratch_operands = 0 : i64, tpu.core_type = #tpu.core_type<tc>} {
    %c0 = arith.constant 0 : index
    %c0_0 = arith.constant 0 : index
    %0 = vector.load %arg0[%c0, %c0_0] : memref<16x4xf32, #tpu.memory_space<vmem>>, vector<16x4xf32>
    %c0_1 = arith.constant 0 : index
    %c0_2 = arith.constant 0 : index
    %1 = vector.load %arg1[%c0_1, %c0_2] : memref<4x128xf32, #tpu.memory_space<vmem>>, vector<4x128xf32>
    %cst = arith.constant dense<0.000000e+00> : vector<16x128xf32>
    %2 = tpu.matmul %0, %1, %cst {dimension_numbers = #tpu.dot_dimension_numbers<[1], [0], [0], [1], [0, 0, 1, 1], [], []>} : vector<16x4xf32>, vector<4x128xf32>, vector<16x128xf32> -> vector<16x128xf32>
    %c0_3 = arith.constant 0 : index
    %c0_4 = arith.constant 0 : index
    %3 = vector.load %arg3[%c0_3, %c0_4] : memref<1x128xf32, #tpu.memory_space<vmem>>, vector<1x128xf32>
    %4 = vector.broadcast %3 : vector<1x128xf32> to vector<16x128xf32>
    %5 = arith.addf %2, %4 : vector<16x128xf32>
    %6 = vector.shape_cast %5 : vector<16x128xf32> to vector<2x8x128xf32>
    %c0_5 = arith.constant 0 : index
    %c0_6 = arith.constant 0 : index
    %7 = vector.load %arg2[%c0_5, %c0_6] : memref<128x128xbf16, #tpu.memory_space<vmem>>, vector<128x128xbf16>
    %8 = vector.extract_strided_slice %6 {offsets = [0, 0, 0], sizes = [2, 1, 128], strides = [1, 1, 1]} : vector<2x8x128xf32> to vector<2x1x128xf32>
    %9 = vector.shape_cast %8 : vector<2x1x128xf32> to vector<2x128xf32>
    %10 = math.tanh %9 : vector<2x128xf32>
    %11 = arith.truncf %10 : vector<2x128xf32> to vector<2x128xbf16>
    %cst_7 = arith.constant dense<0.000000e+00> : vector<2x128xf32>
    %12 = tpu.matmul %11, %7, %cst_7 {dimension_numbers = #tpu.dot_dimension_numbers<[1], [0], [0], [1], [0, 0, 1, 1], [], []>} : vector<2x128xbf16>, vector<128x128xbf16>, vector<2x128xf32> -> vector<2x128xf32>
    %13 = vector.extract_strided_slice %6 {offsets = [0, 1, 0], sizes = [2, 1, 128], strides = [1, 1, 1]} : vector<2x8x128xf32> to vector<2x1x128xf32>
    %14 = vector.shape_cast %13 : vector<2x1x128xf32> to vector<2x128xf32>
    %15 = arith.addf %14, %12 : vector<2x128xf32>
    %16 = math.tanh %15 : vector<2x128xf32>
    %17 = arith.truncf %16 : vector<2x128xf32> to vector<2x128xbf16>
    %cst_8 = arith.constant dense<0.000000e+00> : vector<2x128xf32>
    %18 = tpu.matmul %17, %7, %cst_8 {dimension_numbers = #tpu.dot_dimension_numbers<[1], [0], [0], [1], [0, 0, 1, 1], [], []>} : vector<2x128xbf16>, vector<128x128xbf16>, vector<2x128xf32> -> vector<2x128xf32>
    %19 = vector.extract_strided_slice %6 {offsets = [0, 2, 0], sizes = [2, 1, 128], strides = [1, 1, 1]} : vector<2x8x128xf32> to vector<2x1x128xf32>
    %20 = vector.shape_cast %19 : vector<2x1x128xf32> to vector<2x128xf32>
    %21 = arith.addf %20, %18 : vector<2x128xf32>
    %22 = math.tanh %21 : vector<2x128xf32>
    %23 = arith.truncf %22 : vector<2x128xf32> to vector<2x128xbf16>
    %cst_9 = arith.constant dense<0.000000e+00> : vector<2x128xf32>
    %24 = tpu.matmul %23, %7, %cst_9 {dimension_numbers = #tpu.dot_dimension_numbers<[1], [0], [0], [1], [0, 0, 1, 1], [], []>} : vector<2x128xbf16>, vector<128x128xbf16>, vector<2x128xf32> -> vector<2x128xf32>
    %25 = vector.extract_strided_slice %6 {offsets = [0, 3, 0], sizes = [2, 1, 128], strides = [1, 1, 1]} : vector<2x8x128xf32> to vector<2x1x128xf32>
    %26 = vector.shape_cast %25 : vector<2x1x128xf32> to vector<2x128xf32>
    %27 = arith.addf %26, %24 : vector<2x128xf32>
    %28 = math.tanh %27 : vector<2x128xf32>
    %29 = arith.truncf %28 : vector<2x128xf32> to vector<2x128xbf16>
    %cst_10 = arith.constant dense<0.000000e+00> : vector<2x128xf32>
    %30 = tpu.matmul %29, %7, %cst_10 {dimension_numbers = #tpu.dot_dimension_numbers<[1], [0], [0], [1], [0, 0, 1, 1], [], []>} : vector<2x128xbf16>, vector<128x128xbf16>, vector<2x128xf32> -> vector<2x128xf32>
    %31 = vector.extract_strided_slice %6 {offsets = [0, 4, 0], sizes = [2, 1, 128], strides = [1, 1, 1]} : vector<2x8x128xf32> to vector<2x1x128xf32>
    %32 = vector.shape_cast %31 : vector<2x1x128xf32> to vector<2x128xf32>
    %33 = arith.addf %32, %30 : vector<2x128xf32>
    %34 = math.tanh %33 : vector<2x128xf32>
    %35 = arith.truncf %34 : vector<2x128xf32> to vector<2x128xbf16>
    %cst_11 = arith.constant dense<0.000000e+00> : vector<2x128xf32>
    %36 = tpu.matmul %35, %7, %cst_11 {dimension_numbers = #tpu.dot_dimension_numbers<[1], [0], [0], [1], [0, 0, 1, 1], [], []>} : vector<2x128xbf16>, vector<128x128xbf16>, vector<2x128xf32> -> vector<2x128xf32>
    %37 = vector.extract_strided_slice %6 {offsets = [0, 5, 0], sizes = [2, 1, 128], strides = [1, 1, 1]} : vector<2x8x128xf32> to vector<2x1x128xf32>
    %38 = vector.shape_cast %37 : vector<2x1x128xf32> to vector<2x128xf32>
    %39 = arith.addf %38, %36 : vector<2x128xf32>
    %40 = math.tanh %39 : vector<2x128xf32>
    %41 = arith.truncf %40 : vector<2x128xf32> to vector<2x128xbf16>
    %cst_12 = arith.constant dense<0.000000e+00> : vector<2x128xf32>
    %42 = tpu.matmul %41, %7, %cst_12 {dimension_numbers = #tpu.dot_dimension_numbers<[1], [0], [0], [1], [0, 0, 1, 1], [], []>} : vector<2x128xbf16>, vector<128x128xbf16>, vector<2x128xf32> -> vector<2x128xf32>
    %43 = vector.extract_strided_slice %6 {offsets = [0, 6, 0], sizes = [2, 1, 128], strides = [1, 1, 1]} : vector<2x8x128xf32> to vector<2x1x128xf32>
    %44 = vector.shape_cast %43 : vector<2x1x128xf32> to vector<2x128xf32>
    %45 = arith.addf %44, %42 : vector<2x128xf32>
    %46 = math.tanh %45 : vector<2x128xf32>
    %47 = arith.truncf %46 : vector<2x128xf32> to vector<2x128xbf16>
    %cst_13 = arith.constant dense<0.000000e+00> : vector<2x128xf32>
    %48 = tpu.matmul %47, %7, %cst_13 {dimension_numbers = #tpu.dot_dimension_numbers<[1], [0], [0], [1], [0, 0, 1, 1], [], []>} : vector<2x128xbf16>, vector<128x128xbf16>, vector<2x128xf32> -> vector<2x128xf32>
    %49 = vector.extract_strided_slice %6 {offsets = [0, 7, 0], sizes = [2, 1, 128], strides = [1, 1, 1]} : vector<2x8x128xf32> to vector<2x1x128xf32>
    %50 = vector.shape_cast %49 : vector<2x1x128xf32> to vector<2x128xf32>
    %51 = arith.addf %50, %48 : vector<2x128xf32>
    %52 = math.tanh %51 : vector<2x128xf32>
    %c0_14 = arith.constant 0 : index
    %c0_15 = arith.constant 0 : index
    %53 = vector.load %arg4[%c0_14, %c0_15] : memref<128x40xf32, #tpu.memory_space<vmem>>, vector<128x40xf32>
    %cst_16 = arith.constant dense<0.000000e+00> : vector<2x40xf32>
    %54 = tpu.matmul %52, %53, %cst_16 {dimension_numbers = #tpu.dot_dimension_numbers<[1], [0], [0], [1], [0, 0, 1, 1], [], []>} : vector<2x128xf32>, vector<128x40xf32>, vector<2x40xf32> -> vector<2x40xf32>
    %c0_17 = arith.constant 0 : index
    %c0_18 = arith.constant 0 : index
    %55 = vector.load %arg5[%c0_17, %c0_18] : memref<1x40xf32, #tpu.memory_space<vmem>>, vector<1x40xf32>
    %56 = vector.broadcast %55 : vector<1x40xf32> to vector<2x40xf32>
    %57 = arith.addf %54, %56 : vector<2x40xf32>
    %c0_19 = arith.constant 0 : index
    %c0_20 = arith.constant 0 : index
    %58 = vector.load %arg6[%c0_19, %c0_20] : memref<2x40xf32, #tpu.memory_space<vmem>>, vector<2x40xf32>
    tpu.vector_store %arg6[%c0_19, %c0_20], %57 {strides = array<i32>} : memref<2x40xf32, #tpu.memory_space<vmem>>, vector<2x40xf32>,
    return
  }
}

</mosaic_0001>

<llo_original>
// kernel: rnn_predictor.1
$region0: #{rnn_predictor.1}
  #allocation0 [shape = 'u32[]', space=smem, size = 0x4, offset = 0x4, fixed_abs, tag = 'smem constant byte address 0x4 - core index']
  #allocation1 [shape = 'u32[144,128]{1,0:T(1,128)}', space=vmem, size = 0x12000, scoped, tag = 'internal scratch']
  %s0 = inlined_call_operand.vmem [shape: f32[16,4], index: 0, kind: input, shape index: {}]
  %s1 = inlined_call_operand.vmem [shape: f32[4,128], index: 1, kind: input, shape index: {}]
  %s2 = inlined_call_operand.vmem [shape: bf16[128,128], index: 2, kind: input, shape index: {}]
  %s3 = inlined_call_operand.vmem [shape: f32[1,128], index: 3, kind: input, shape index: {}]
  %s4 = inlined_call_operand.vmem [shape: f32[128,40], index: 4, kind: input, shape index: {}]
  %s5 = inlined_call_operand.vmem [shape: f32[1,40], index: 5, kind: input, shape index: {}]
  %s6 = inlined_call_operand.hbm [shape: f32[2,40], index: 6, kind: output, shape index: {}]
  %s7 = sld [smem:[#allocation0]]
  $region34: #{rnn_predictor.1} parent=0
    _
  %s9 = ssub.s32 1, %s7
  %s10 = scalar_select 0, %s9, %s7
  $region1: #{rnn_predictor.1} parent=0
    #allocation2 [shape = 'u8[1024]{0}', space=vmem, size = 0x400, scoped, tag = 'output window, operand 0, single buffered']
    #allocation3 [shape = 's32[1]{0}', space=sflag, size = 0x4, scoped, tag = 'scoped memory for rnn_predictor.1']
    %11 = vsyncpa [#allocation3], 0
    // Predicated region
    $region2: #{rnn_predictor.1} parent=1 // pred_check
      _
    $region3: #{rnn_predictor.1} parent=1 // pred_check_branch
      %13 = sbr.rel (0) target = $region5
    $region4: #{rnn_predictor.1} parent=1 // pred_region
      _
    $region5: #{rnn_predictor.1} parent=1 // pred_fallthru
      _
    // Predicated region
    $region6: #{rnn_predictor.1} parent=1 // pred_check
      _
    $region7: #{rnn_predictor.1} parent=1 // pred_check_branch
      %15 = sbr.rel (0) target = $region9
    $region8: #{rnn_predictor.1} parent=1 // pred_region
      _
    $region9: #{rnn_predictor.1} parent=1 // pred_fallthru
      _
    // Predicated region
    $region10: #{rnn_predictor.1} parent=1 // pred_check
      _
    $region11: #{rnn_predictor.1} parent=1 // pred_check_branch
      %17 = sbr.rel (0) target = $region13
    $region12: #{rnn_predictor.1} parent=1 // pred_region
      _
    $region13: #{rnn_predictor.1} parent=1 // pred_fallthru
      _
    // Predicated region
    $region14: #{rnn_predictor.1} parent=1 // pred_check
      _
    $region15: #{rnn_predictor.1} parent=1 // pred_check_branch
      %19 = sbr.rel (0) target = $region17
    $region16: #{rnn_predictor.1} parent=1 // pred_region
      _
    $region17: #{rnn_predictor.1} parent=1 // pred_fallthru
      _
    // Predicated region
    $region18: #{rnn_predictor.1} parent=1 // pred_check
      _
    $region19: #{rnn_predictor.1} parent=1 // pred_check_branch
      %21 = sbr.rel (0) target = $region21
    $region20: #{rnn_predictor.1} parent=1 // pred_region
      _
    $region21: #{rnn_predictor.1} parent=1 // pred_fallthru
      _
    // Predicated region
    $region22: #{rnn_predictor.1} parent=1 // pred_check
      _
    $region23: #{rnn_predictor.1} parent=1 // pred_check_branch
      %23 = sbr.rel (0) target = $region25
    $region24: #{rnn_predictor.1} parent=1 // pred_region
      _
    $region25: #{rnn_predictor.1} parent=1 // pred_fallthru
      _
    %v25 = vld [vmem:[%s0] sm:$0xff]
    %v26 = vld [vmem:[%s0 + $0x8] sm:$0xff]
    %v27 = vld [vmem:[%s1] sm:$0xf]
    %v28 = vld [vmem:[%s3] sm:$0x1]
    %v30 = vlaneseq
    %v31 = vshrl.u32 %v30, 7
    %v32 = vsub.s32 0, %v31
    %v33 = vrot.slane %v28, %v32
    %vm35 = vcmask 31744
    %v37 = vsel %vm35, %v25, 0
    %v40 = vsel %vm35, %v26, 0
    %vm42 = vcmask 1043456
    %v44 = vsel %vm42, %v27, 0
    %46 = vmatprep.subr.mxu0 0.0
    %47 = vmatpush1.msra.mxu0 %v44
    %48 = vmatprep.subr.mxu0 0.0
    %49 = vmatpush1.msra.mxu0 0.0
    %50 = vmatprep.subr.mxu0 0.0
    %51 = vmatpush1.msra.mxu0 0.0
    %52 = vmatprep.subr.mxu0 0.0
    %53 = vmatpush1.msra.mxu0 0.0
    %54 = vmatprep.subr.mxu0 0.0
    %55 = vmatpush1.msra.mxu0 0.0
    %56 = vmatprep.subr.mxu0 0.0
    %57 = vmatpush1.msra.mxu0 0.0
    %58 = vmatprep.subr.mxu0 0.0
    %59 = vmatpush1.msra.mxu0 0.0
    %60 = vmatprep.subr.mxu0 0.0
    %61 = vmatpush1.msra.mxu0 0.0
    %62 = vmatprep.subr.mxu0 0.0
    %63 = vmatpush1.msra.mxu0 0.0
    %64 = vmatprep.subr.mxu0 0.0
    %65 = vmatpush1.msra.mxu0 0.0
    %66 = vmatprep.subr.mxu0 0.0
    %67 = vmatpush1.msra.mxu0 0.0
    %68 = vmatprep.subr.mxu0 0.0
    %69 = vmatpush1.msra.mxu0 0.0
    %70 = vmatprep.subr.mxu0 0.0
    %71 = vmatpush1.msra.mxu0 0.0
    %72 = vmatprep.subr.mxu0 0.0
    %73 = vmatpush1.msra.mxu0 0.0
    %74 = vmatprep.subr.mxu0 0.0
    %75 = vmatpush1.msra.mxu0 0.0
    %76 = vmatprep.subr.mxu0 0.0
    %77 = vmatpush1.msra.mxu0 0.0
    %78 = vmatprep.subr.mxu0 0.0
    %79 = vmatpush1.msra.mxu0 0.0
    %80 = vmatprep.subr.mxu0 0.0
    %81 = vmatpush1.msra.mxu0 0.0
    %82 = vmatprep.subr.mxu0 0.0
    %83 = vmatpush1.msra.mxu0 0.0
    %84 = vmatprep.subr.mxu0 0.0
    %85 = vmatpush1.msra.mxu0 0.0
    %86 = vmatprep.subr.mxu0 0.0
    %87 = vmatpush1.msra.mxu0 0.0
    %88 = vmatprep.subr.mxu0 0.0
    %89 = vmatpush1.msra.mxu0 0.0
    %90 = vmatprep.subr.mxu0 0.0
    %91 = vmatpush1.msra.mxu0 0.0
    %92 = vmatprep.subr.mxu0 0.0
    %93 = vmatpush1.msra.mxu0 0.0
    %94 = vmatprep.subr.mxu0 0.0
    %95 = vmatpush1.msra.mxu0 0.0
    %96 = vmatprep.subr.mxu0 0.0
    %97 = vmatpush1.msra.mxu0 0.0
    %98 = vmatprep.subr.mxu0 0.0
    %99 = vmatpush1.msra.mxu0 0.0
    %100 = vmatprep.subr.mxu0 0.0
    %101 = vmatpush1.msra.mxu0 0.0
    %102 = vmatprep.subr.mxu0 0.0
    %103 = vmatpush1.msra.mxu0 0.0
    %104 = vmatprep.subr.mxu0 0.0
    %105 = vmatpush1.msra.mxu0 0.0
    %106 = vmatprep.subr.mxu0 0.0
    %107 = vmatpush1.msra.mxu0 0.0
    %108 = vmatprep.subr.mxu0 0.0
    %109 = vmatpush1.msra.mxu0 0.0
    %110 = vmatprep.mubr.f32.mxu0 0.0
    %111 = vmatmul.mubr.f32.gmra.mrb[0].mxu0 %v37
    %v112 = vpop.f32.mrb[0].mxu0
    %v113 = vadd.f32 %v33, %v112
    %v114 = vpop.f32.mrb[0].mxu0
    %115 = vmatprep.mubr.f32.mxu0 0.0
    %116 = vmatmul.mubr.f32.gmra.mrb[0].mxu0 %v40
    %v117 = vpop.f32.mrb[0].mxu0
    %v118 = vadd.f32 %v33, %v117
    %v119 = vpop.f32.mrb[0].mxu0
    %120 = vdwg.mxu0
    %v121 = vld [vmem:[%s2] sm:$0xf]
    %v122 = vld [vmem:[%s2 + $0x4] sm:$0xf]
    %v123 = vld [vmem:[%s2 + $0x8] sm:$0xf]
    %v124 = vld [vmem:[%s2 + $0xc] sm:$0xf]
    %v125 = vld [vmem:[%s2 + $0x10] sm:$0xf]
    %v126 = vld [vmem:[%s2 + $0x14] sm:$0xf]
    %v127 = vld [vmem:[%s2 + $0x18] sm:$0xf]
    %v128 = vld [vmem:[%s2 + $0x1c] sm:$0xf]
    %v129 = vld [vmem:[%s2 + $0x20] sm:$0xf]
    %v130 = vld [vmem:[%s2 + $0x24] sm:$0xf]
    %v131 = vld [vmem:[%s2 + $0x28] sm:$0xf]
    %v132 = vld [vmem:[%s2 + $0x2c] sm:$0xf]
    %v133 = vld [vmem:[%s2 + $0x30] sm:$0xf]
    %v134 = vld [vmem:[%s2 + $0x34] sm:$0xf]
    %v135 = vld [vmem:[%s2 + $0x38] sm:$0xf]
    %v136 = vld [vmem:[%s2 + $0x3c] sm:$0xf]
    %v137 = vtanh.pop %v113
    %v138 = vtanh.pop %v118
    %v139 = vpack.c.bf16 %v137, %v137
    %v140 = vpack.c.bf16 %v138, %v138
    %v143 = vunpack.c.l.b16 %v139
    %v144 = vunpack.c.l.b16 %v140
    %v145 = vrot.slane %v144, 7
    %vm146 = vcmask 1041409
    %v147 = vsel %vm146, %v145, %v143
    %v148 = vpack.c.b16 %v147, %v147
    %v166 = vunpack.c.l.b16 %v121
    %v167 = vunpack.c.l.b16 %v122
    %v168 = vunpack.c.l.b16 %v123
    %v169 = vunpack.c.l.b16 %v124
    %v170 = vunpack.c.l.b16 %v125
    %v171 = vunpack.c.l.b16 %v126
    %v172 = vunpack.c.l.b16 %v127
    %v173 = vunpack.c.l.b16 %v128
    %v174 = vunpack.c.l.b16 %v129
    %v175 = vunpack.c.l.b16 %v130
    %v176 = vunpack.c.l.b16 %v131
    %v177 = vunpack.c.l.b16 %v132
    %v178 = vunpack.c.l.b16 %v133
    %v179 = vunpack.c.l.b16 %v134
    %v180 = vunpack.c.l.b16 %v135
    %v181 = vunpack.c.l.b16 %v136
    %v182 = vpack.c.b16 %v167, %v166
    %v183 = vpack.c.b16 %v169, %v168
    %v184 = vpack.c.b16 %v171, %v170
    %v185 = vpack.c.b16 %v173, %v172
    %v186 = vpack.c.b16 %v175, %v174
    %v187 = vpack.c.b16 %v177, %v176
    %v188 = vpack.c.b16 %v179, %v178
    %v189 = vpack.c.b16 %v181, %v180
    %198 = vmatprep.subr.bf16.mxu0 0
    %199 = vmatpush1.bf16.msra.mxu0 %v182
    %200 = vmatprep.subr.bf16.mxu0 0
    %201 = vmatpush1.bf16.msra.mxu0 %v183
    %202 = vmatprep.subr.bf16.mxu0 0
    %203 = vmatpush1.bf16.msra.mxu0 %v184
    %204 = vmatprep.subr.bf16.mxu0 0
    %205 = vmatpush1.bf16.msra.mxu0 %v185
    %206 = vmatprep.subr.bf16.mxu0 0
    %207 = vmatpush1.bf16.msra.mxu0 %v186
    %208 = vmatprep.subr.bf16.mxu0 0
    %209 = vmatpush1.bf16.msra.mxu0 %v187
    %210 = vmatprep.subr.bf16.mxu0 0
    %211 = vmatpush1.bf16.msra.mxu0 %v188
    %212 = vmatprep.subr.bf16.mxu0 0
    %213 = vmatpush1.bf16.msra.mxu0 %v189
    %214 = vmatprep.subr.bf16.mxu0 0
    %215 = vmatpush1.bf16.msra.mxu0 0
    %216 = vmatprep.subr.bf16.mxu0 0
    %217 = vmatpush1.bf16.msra.mxu0 0
    %218 = vmatprep.subr.bf16.mxu0 0
    %219 = vmatpush1.bf16.msra.mxu0 0
    %220 = vmatprep.subr.bf16.mxu0 0
    %221 = vmatpush1.bf16.msra.mxu0 0
    %222 = vmatprep.subr.bf16.mxu0 0
    %223 = vmatpush1.bf16.msra.mxu0 0
    %224 = vmatprep.subr.bf16.mxu0 0
    %225 = vmatpush1.bf16.msra.mxu0 0
    %226 = vmatprep.subr.bf16.mxu0 0
    %227 = vmatpush1.bf16.msra.mxu0 0
    %228 = vmatprep.subr.bf16.mxu0 0
    %229 = vmatpush1.bf16.msra.mxu0 0
    %230 = vmatprep.mubr.bf16.mxu0 0
    %231 = vmatmul.mubr.bf16.gmra.mrb[0].mxu0 %v148
    %v232 = vpop.f32.mrb[0].mxu0
    %v233 = vadd.f32 0.0, %v232
    %v234 = vpop.f32.mrb[0].mxu0
    %v235 = vpop.f32.mrb[0].mxu0
    %v236 = vpop.f32.mrb[0].mxu0
    %237 = vdwg.mxu0
    %v239 = vrot.slane %v233, 7
    %v242 = vadd.f32 %v113, %v239
    %v243 = vadd.f32 %v118, %v233
    %v244 = vtanh.pop %v242
    %v245 = vtanh.pop %v243
    %v246 = vpack.c.bf16 %v244, %v244
    %v247 = vpack.c.bf16 %v245, %v245
    %v250 = vunpack.c.l.b16 %v246
    %v251 = vunpack.c.l.b16 %v247
    %v252 = vrot.slane %v250, 1
    %v253 = vsel %vm146, %v251, %v252
    %v254 = vpack.c.b16 %v253, %v253
    %256 = vmatprep.subr.bf16.mxu0 0
    %257 = vmatpush1.bf16.msra.mxu0 %v182
    %258 = vmatprep.subr.bf16.mxu0 0
    %259 = vmatpush1.bf16.msra.mxu0 %v183
    %260 = vmatprep.subr.bf16.mxu0 0
    %261 = vmatpush1.bf16.msra.mxu0 %v184
    %262 = vmatprep.subr.bf16.mxu0 0
    %263 = vmatpush1.bf16.msra.mxu0 %v185
    %264 = vmatprep.subr.bf16.mxu0 0
    %265 = vmatpush1.bf16.msra.mxu0 %v186
    %266 = vmatprep.subr.bf16.mxu0 0
    %267 = vmatpush1.bf16.msra.mxu0 %v187
    %268 = vmatprep.subr.bf16.mxu0 0
    %269 = vmatpush1.bf16.msra.mxu0 %v188
    %270 = vmatprep.subr.bf16.mxu0 0
    %271 = vmatpush1.bf16.msra.mxu0 %v189
    %272 = vmatprep.subr.bf16.mxu0 0
    %273 = vmatpush1.bf16.msra.mxu0 0
    %274 = vmatprep.subr.bf16.mxu0 0
    %275 = vmatpush1.bf16.msra.mxu0 0
    %276 = vmatprep.subr.bf16.mxu0 0
    %277 = vmatpush1.bf16.msra.mxu0 0
    %278 = vmatprep.subr.bf16.mxu0 0
    %279 = vmatpush1.bf16.msra.mxu0 0
    %280 = vmatprep.subr.bf16.mxu0 0
    %281 = vmatpush1.bf16.msra.mxu0 0
    %282 = vmatprep.subr.bf16.mxu0 0
    %283 = vmatpush1.bf16.msra.mxu0 0
    %284 = vmatprep.subr.bf16.mxu0 0
    %285 = vmatpush1.bf16.msra.mxu0 0
    %286 = vmatprep.subr.bf16.mxu0 0
    %287 = vmatpush1.bf16.msra.mxu0 0
    %288 = vmatprep.mubr.bf16.mxu0 0
    %289 = vmatmul.mubr.bf16.gmra.mrb[0].mxu0 %v254
    %v290 = vpop.f32.mrb[0].mxu0
    %v291 = vadd.f32 0.0, %v290
    %v292 = vpop.f32.mrb[0].mxu0
    %v293 = vpop.f32.mrb[0].mxu0
    %v294 = vpop.f32.mrb[0].mxu0
    %295 = vdwg.mxu0
    %v297 = vrot.slane %v291, 6
    %v298 = vrot.slane %v291, 7
    %v301 = vadd.f32 %v113, %v297
    %v302 = vadd.f32 %v118, %v298
    %v303 = vtanh.pop %v301
    %v304 = vtanh.pop %v302
    %v305 = vpack.c.bf16 %v303, %v303
    %v306 = vpack.c.bf16 %v304, %v304
    %v309 = vunpack.c.l.b16 %v305
    %v310 = vunpack.c.l.b16 %v306
    %v311 = vrot.slane %v309, 2
    %v312 = vrot.slane %v310, 1
    %v313 = vsel %vm146, %v312, %v311
    %v314 = vpack.c.b16 %v313, %v313
    %316 = vmatprep.subr.bf16.mxu0 0
    %317 = vmatpush1.bf16.msra.mxu0 %v182
    %318 = vmatprep.subr.bf16.mxu0 0
    %319 = vmatpush1.bf16.msra.mxu0 %v183
    %320 = vmatprep.subr.bf16.mxu0 0
    %321 = vmatpush1.bf16.msra.mxu0 %v184
    %322 = vmatprep.subr.bf16.mxu0 0
    %323 = vmatpush1.bf16.msra.mxu0 %v185
    %324 = vmatprep.subr.bf16.mxu0 0
    %325 = vmatpush1.bf16.msra.mxu0 %v186
    %326 = vmatprep.subr.bf16.mxu0 0
    %327 = vmatpush1.bf16.msra.mxu0 %v187
    %328 = vmatprep.subr.bf16.mxu0 0
    %329 = vmatpush1.bf16.msra.mxu0 %v188
    %330 = vmatprep.subr.bf16.mxu0 0
    %331 = vmatpush1.bf16.msra.mxu0 %v189
    %332 = vmatprep.subr.bf16.mxu0 0
    %333 = vmatpush1.bf16.msra.mxu0 0
    %334 = vmatprep.subr.bf16.mxu0 0
    %335 = vmatpush1.bf16.msra.mxu0 0
    %336 = vmatprep.subr.bf16.mxu0 0
    %337 = vmatpush1.bf16.msra.mxu0 0
    %338 = vmatprep.subr.bf16.mxu0 0
    %339 = vmatpush1.bf16.msra.mxu0 0
    %340 = vmatprep.subr.bf16.mxu0 0
    %341 = vmatpush1.bf16.msra.mxu0 0
    %342 = vmatprep.subr.bf16.mxu0 0
    %343 = vmatpush1.bf16.msra.mxu0 0
    %344 = vmatprep.subr.bf16.mxu0 0
    %345 = vmatpush1.bf16.msra.mxu0 0
    %346 = vmatprep.subr.bf16.mxu0 0
    %347 = vmatpush1.bf16.msra.mxu0 0
    %348 = vmatprep.mubr.bf16.mxu0 0
    %349 = vmatmul.mubr.bf16.gmra.mrb[0].mxu0 %v314
    %v350 = vpop.f32.mrb[0].mxu0
    %v351 = vadd.f32 0.0, %v350
    %v352 = vpop.f32.mrb[0].mxu0
    %v353 = vpop.f32.mrb[0].mxu0
    %v354 = vpop.f32.mrb[0].mxu0
    %355 = vdwg.mxu0
    %v357 = vrot.slane %v351, 5
    %v358 = vrot.slane %v351, 6
    %v361 = vadd.f32 %v113, %v357
    %v362 = vadd.f32 %v118, %v358
    %v363 = vtanh.pop %v361
    %v364 = vtanh.pop %v362
    %v365 = vpack.c.bf16 %v363, %v363
    %v366 = vpack.c.bf16 %v364, %v364
    %v369 = vunpack.c.l.b16 %v365
    %v370 = vunpack.c.l.b16 %v366
    %v371 = vrot.slane %v369, 3
    %v372 = vrot.slane %v370, 2
    %v373 = vsel %vm146, %v372, %v371
    %v374 = vpack.c.b16 %v373, %v373
    %376 = vmatprep.subr.bf16.mxu0 0
    %377 = vmatpush1.bf16.msra.mxu0 %v182
    %378 = vmatprep.subr.bf16.mxu0 0
    %379 = vmatpush1.bf16.msra.mxu0 %v183
    %380 = vmatprep.subr.bf16.mxu0 0
    %381 = vmatpush1.bf16.msra.mxu0 %v184
    %382 = vmatprep.subr.bf16.mxu0 0
    %383 = vmatpush1.bf16.msra.mxu0 %v185
    %384 = vmatprep.subr.bf16.mxu0 0
    %385 = vmatpush1.bf16.msra.mxu0 %v186
    %386 = vmatprep.subr.bf16.mxu0 0
    %387 = vmatpush1.bf16.msra.mxu0 %v187
    %388 = vmatprep.subr.bf16.mxu0 0
    %389 = vmatpush1.bf16.msra.mxu0 %v188
    %390 = vmatprep.subr.bf16.mxu0 0
    %391 = vmatpush1.bf16.msra.mxu0 %v189
    %392 = vmatprep.subr.bf16.mxu0 0
    %393 = vmatpush1.bf16.msra.mxu0 0
    %394 = vmatprep.subr.bf16.mxu0 0
    %395 = vmatpush1.bf16.msra.mxu0 0
    %396 = vmatprep.subr.bf16.mxu0 0
    %397 = vmatpush1.bf16.msra.mxu0 0
    %398 = vmatprep.subr.bf16.mxu0 0
    %399 = vmatpush1.bf16.msra.mxu0 0
    %400 = vmatprep.subr.bf16.mxu0 0
    %401 = vmatpush1.bf16.msra.mxu0 0
    %402 = vmatprep.subr.bf16.mxu0 0
    %403 = vmatpush1.bf16.msra.mxu0 0
    %404 = vmatprep.subr.bf16.mxu0 0
    %405 = vmatpush1.bf16.msra.mxu0 0
    %406 = vmatprep.subr.bf16.mxu0 0
    %407 = vmatpush1.bf16.msra.mxu0 0
    %408 = vmatprep.mubr.bf16.mxu0 0
    %409 = vmatmul.mubr.bf16.gmra.mrb[0].mxu0 %v374
    %v410 = vpop.f32.mrb[0].mxu0
    %v411 = vadd.f32 0.0, %v410
    %v412 = vpop.f32.mrb[0].mxu0
    %v413 = vpop.f32.mrb[0].mxu0
    %v414 = vpop.f32.mrb[0].mxu0
    %415 = vdwg.mxu0
    %v417 = vrot.slane %v411, 4
    %v418 = vrot.slane %v411, 5
    %v421 = vadd.f32 %v113, %v417
    %v422 = vadd.f32 %v118, %v418
    %v423 = vtanh.pop %v421
    %v424 = vtanh.pop %v422
    %v425 = vpack.c.bf16 %v423, %v423
    %v426 = vpack.c.bf16 %v424, %v424
    %v429 = vunpack.c.l.b16 %v425
    %v430 = vunpack.c.l.b16 %v426
    %v431 = vrot.slane %v429, 4
    %v432 = vrot.slane %v430, 3
    %v433 = vsel %vm146, %v432, %v431
    %v434 = vpack.c.b16 %v433, %v433
    %436 = vmatprep.subr.bf16.mxu0 0
    %437 = vmatpush1.bf16.msra.mxu0 %v182
    %438 = vmatprep.subr.bf16.mxu0 0
    %439 = vmatpush1.bf16.msra.mxu0 %v183
    %440 = vmatprep.subr.bf16.mxu0 0
    %441 = vmatpush1.bf16.msra.mxu0 %v184
    %442 = vmatprep.subr.bf16.mxu0 0
    %443 = vmatpush1.bf16.msra.mxu0 %v185
    %444 = vmatprep.subr.bf16.mxu0 0
    %445 = vmatpush1.bf16.msra.mxu0 %v186
    %446 = vmatprep.subr.bf16.mxu0 0
    %447 = vmatpush1.bf16.msra.mxu0 %v187
    %448 = vmatprep.subr.bf16.mxu0 0
    %449 = vmatpush1.bf16.msra.mxu0 %v188
    %450 = vmatprep.subr.bf16.mxu0 0
    %451 = vmatpush1.bf16.msra.mxu0 %v189
    %452 = vmatprep.subr.bf16.mxu0 0
    %453 = vmatpush1.bf16.msra.mxu0 0
    %454 = vmatprep.subr.bf16.mxu0 0
    %455 = vmatpush1.bf16.msra.mxu0 0
    %456 = vmatprep.subr.bf16.mxu0 0
    %457 = vmatpush1.bf16.msra.mxu0 0
    %458 = vmatprep.subr.bf16.mxu0 0
    %459 = vmatpush1.bf16.msra.mxu0 0
    %460 = vmatprep.subr.bf16.mxu0 0
    %461 = vmatpush1.bf16.msra.mxu0 0
    %462 = vmatprep.subr.bf16.mxu0 0
    %463 = vmatpush1.bf16.msra.mxu0 0
    %464 = vmatprep.subr.bf16.mxu0 0
    %465 = vmatpush1.bf16.msra.mxu0 0
    %466 = vmatprep.subr.bf16.mxu0 0
    %467 = vmatpush1.bf16.msra.mxu0 0
    %468 = vmatprep.mubr.bf16.mxu0 0
    %469 = vmatmul.mubr.bf16.gmra.mrb[0].mxu0 %v434
    %v470 = vpop.f32.mrb[0].mxu0
    %v471 = vadd.f32 0.0, %v470
    %v472 = vpop.f32.mrb[0].mxu0
    %v473 = vpop.f32.mrb[0].mxu0
    %v474 = vpop.f32.mrb[0].mxu0
    %475 = vdwg.mxu0
    %v477 = vrot.slane %v471, 3
    %v478 = vrot.slane %v471, 4
    %v481 = vadd.f32 %v113, %v477
    %v482 = vadd.f32 %v118, %v478
    %v483 = vtanh.pop %v481
    %v484 = vtanh.pop %v482
    %v485 = vpack.c.bf16 %v483, %v483
    %v486 = vpack.c.bf16 %v484, %v484
    %v489 = vunpack.c.l.b16 %v485
    %v490 = vunpack.c.l.b16 %v486
    %v491 = vrot.slane %v489, 5
    %v492 = vrot.slane %v490, 4
    %v493 = vsel %vm146, %v492, %v491
    %v494 = vpack.c.b16 %v493, %v493
    %496 = vmatprep.subr.bf16.mxu0 0
    %497 = vmatpush1.bf16.msra.mxu0 %v182
    %498 = vmatprep.subr.bf16.mxu0 0
    %499 = vmatpush1.bf16.msra.mxu0 %v183
    %500 = vmatprep.subr.bf16.mxu0 0
    %501 = vmatpush1.bf16.msra.mxu0 %v184
    %502 = vmatprep.subr.bf16.mxu0 0
    %503 = vmatpush1.bf16.msra.mxu0 %v185
    %504 = vmatprep.subr.bf16.mxu0 0
    %505 = vmatpush1.bf16.msra.mxu0 %v186
    %506 = vmatprep.subr.bf16.mxu0 0
    %507 = vmatpush1.bf16.msra.mxu0 %v187
    %508 = vmatprep.subr.bf16.mxu0 0
    %509 = vmatpush1.bf16.msra.mxu0 %v188
    %510 = vmatprep.subr.bf16.mxu0 0
    %511 = vmatpush1.bf16.msra.mxu0 %v189
    %512 = vmatprep.subr.bf16.mxu0 0
    %513 = vmatpush1.bf16.msra.mxu0 0
    %514 = vmatprep.subr.bf16.mxu0 0
    %515 = vmatpush1.bf16.msra.mxu0 0
    %516 = vmatprep.subr.bf16.mxu0 0
    %517 = vmatpush1.bf16.msra.mxu0 0
    %518 = vmatprep.subr.bf16.mxu0 0
    %519 = vmatpush1.bf16.msra.mxu0 0
    %520 = vmatprep.subr.bf16.mxu0 0
    %521 = vmatpush1.bf16.msra.mxu0 0
    %522 = vmatprep.subr.bf16.mxu0 0
    %523 = vmatpush1.bf16.msra.mxu0 0
    %524 = vmatprep.subr.bf16.mxu0 0
    %525 = vmatpush1.bf16.msra.mxu0 0
    %526 = vmatprep.subr.bf16.mxu0 0
    %527 = vmatpush1.bf16.msra.mxu0 0
    %528 = vmatprep.mubr.bf16.mxu0 0
    %529 = vmatmul.mubr.bf16.gmra.mrb[0].mxu0 %v494
    %v530 = vpop.f32.mrb[0].mxu0
    %v531 = vadd.f32 0.0, %v530
    %v532 = vpop.f32.mrb[0].mxu0
    %v533 = vpop.f32.mrb[0].mxu0
    %v534 = vpop.f32.mrb[0].mxu0
    %535 = vdwg.mxu0
    %v537 = vrot.slane %v531, 2
    %v538 = vrot.slane %v531, 3
    %v541 = vadd.f32 %v113, %v537
    %v542 = vadd.f32 %v118, %v538
    %v543 = vtanh.pop %v541
    %v544 = vtanh.pop %v542
    %v545 = vpack.c.bf16 %v543, %v543
    %v546 = vpack.c.bf16 %v544, %v544
    %v549 = vunpack.c.l.b16 %v545
    %v550 = vunpack.c.l.b16 %v546
    %v551 = vrot.slane %v549, 6
    %v552 = vrot.slane %v550, 5
    %v553 = vsel %vm146, %v552, %v551
    %v554 = vpack.c.b16 %v553, %v553
    %556 = vmatprep.subr.bf16.mxu0 0
    %557 = vmatpush1.bf16.msra.mxu0 %v182
    %558 = vmatprep.subr.bf16.mxu0 0
    %559 = vmatpush1.bf16.msra.mxu0 %v183
    %560 = vmatprep.subr.bf16.mxu0 0
    %561 = vmatpush1.bf16.msra.mxu0 %v184
    %562 = vmatprep.subr.bf16.mxu0 0
    %563 = vmatpush1.bf16.msra.mxu0 %v185
    %564 = vmatprep.subr.bf16.mxu0 0
    %565 = vmatpush1.bf16.msra.mxu0 %v186
    %566 = vmatprep.subr.bf16.mxu0 0
    %567 = vmatpush1.bf16.msra.mxu0 %v187
    %568 = vmatprep.subr.bf16.mxu0 0
    %569 = vmatpush1.bf16.msra.mxu0 %v188
    %570 = vmatprep.subr.bf16.mxu0 0
    %571 = vmatpush1.bf16.msra.mxu0 %v189
    %572 = vmatprep.subr.bf16.mxu0 0
    %573 = vmatpush1.bf16.msra.mxu0 0
    %574 = vmatprep.subr.bf16.mxu0 0
    %575 = vmatpush1.bf16.msra.mxu0 0
    %576 = vmatprep.subr.bf16.mxu0 0
    %577 = vmatpush1.bf16.msra.mxu0 0
    %578 = vmatprep.subr.bf16.mxu0 0
    %579 = vmatpush1.bf16.msra.mxu0 0
    %580 = vmatprep.subr.bf16.mxu0 0
    %581 = vmatpush1.bf16.msra.mxu0 0
    %582 = vmatprep.subr.bf16.mxu0 0
    %583 = vmatpush1.bf16.msra.mxu0 0
    %584 = vmatprep.subr.bf16.mxu0 0
    %585 = vmatpush1.bf16.msra.mxu0 0
    %586 = vmatprep.subr.bf16.mxu0 0
    %587 = vmatpush1.bf16.msra.mxu0 0
    %588 = vmatprep.mubr.bf16.mxu0 0
    %589 = vmatmul.mubr.bf16.gmra.mrb[0].mxu0 %v554
    %v590 = vpop.f32.mrb[0].mxu0
    %v591 = vadd.f32 0.0, %v590
    %v592 = vpop.f32.mrb[0].mxu0
    %v593 = vpop.f32.mrb[0].mxu0
    %v594 = vpop.f32.mrb[0].mxu0
    %595 = vdwg.mxu0
    %v597 = vrot.slane %v591, 1
    %v598 = vrot.slane %v591, 2
    %v601 = vadd.f32 %v113, %v597
    %v602 = vadd.f32 %v118, %v598
    %v603 = vtanh.pop %v601
    %v604 = vtanh.pop %v602
    %v605 = vld [vmem:[%s4] sm:$0xff]
    %v606 = vld [vmem:[%s4 + $0x8] sm:$0xff]
    %v607 = vld [vmem:[%s4 + $0x10] sm:$0xff]
    %v608 = vld [vmem:[%s4 + $0x18] sm:$0xff]
    %v609 = vld [vmem:[%s4 + $0x20] sm:$0xff]
    %v610 = vld [vmem:[%s4 + $0x28] sm:$0xff]
    %v611 = vld [vmem:[%s4 + $0x30] sm:$0xff]
    %v612 = vld [vmem:[%s4 + $0x38] sm:$0xff]
    %v613 = vld [vmem:[%s4 + $0x40] sm:$0xff]
    %v614 = vld [vmem:[%s4 + $0x48] sm:$0xff]
    %v615 = vld [vmem:[%s4 + $0x50] sm:$0xff]
    %v616 = vld [vmem:[%s4 + $0x58] sm:$0xff]
    %v617 = vld [vmem:[%s4 + $0x60] sm:$0xff]
    %v618 = vld [vmem:[%s4 + $0x68] sm:$0xff]
    %v619 = vld [vmem:[%s4 + $0x70] sm:$0xff]
    %v620 = vld [vmem:[%s4 + $0x78] sm:$0xff]
    %v621 = vld [vmem:[%s5] sm:$0x1]
    %v623 = vlaneseq
    %v624 = vshrl.u32 %v623, 7
    %v625 = vsub.s32 0, %v624
    %v626 = vrot.slane %v621, %v625
    %v630 = vrot.slane %v603, 7
    %v631 = vrot.slane %v604, 6
    %v632 = vsel %vm146, %v631, %v630
    %634 = vmatprep.subr.mxu0 0.0
    %635 = vmatpush1.msra.mxu0 %v605
    %636 = vmatprep.subr.mxu0 0.0
    %637 = vmatpush1.msra.mxu0 %v606
    %638 = vmatprep.subr.mxu0 0.0
    %639 = vmatpush1.msra.mxu0 %v607
    %640 = vmatprep.subr.mxu0 0.0
    %641 = vmatpush1.msra.mxu0 %v608
    %642 = vmatprep.subr.mxu0 0.0
    %643 = vmatpush1.msra.mxu0 %v609
    %644 = vmatprep.subr.mxu0 0.0
    %645 = vmatpush1.msra.mxu0 %v610
    %646 = vmatprep.subr.mxu0 0.0
    %647 = vmatpush1.msra.mxu0 %v611
    %648 = vmatprep.subr.mxu0 0.0
    %649 = vmatpush1.msra.mxu0 %v612
    %650 = vmatprep.subr.mxu0 0.0
    %651 = vmatpush1.msra.mxu0 %v613
    %652 = vmatprep.subr.mxu0 0.0
    %653 = vmatpush1.msra.mxu0 %v614
    %654 = vmatprep.subr.mxu0 0.0
    %655 = vmatpush1.msra.mxu0 %v615
    %656 = vmatprep.subr.mxu0 0.0
    %657 = vmatpush1.msra.mxu0 %v616
    %658 = vmatprep.subr.mxu0 0.0
    %659 = vmatpush1.msra.mxu0 %v617
    %660 = vmatprep.subr.mxu0 0.0
    %661 = vmatpush1.msra.mxu0 %v618
    %662 = vmatprep.subr.mxu0 0.0
    %663 = vmatpush1.msra.mxu0 %v619
    %664 = vmatprep.subr.mxu0 0.0
    %665 = vmatpush1.msra.mxu0 %v620
    %666 = vmatprep.subr.mxu0 0.0
    %667 = vmatpush1.msra.mxu0 0.0
    %668 = vmatprep.subr.mxu0 0.0
    %669 = vmatpush1.msra.mxu0 0.0
    %670 = vmatprep.subr.mxu0 0.0
    %671 = vmatpush1.msra.mxu0 0.0
    %672 = vmatprep.subr.mxu0 0.0
    %673 = vmatpush1.msra.mxu0 0.0
    %674 = vmatprep.subr.mxu0 0.0
    %675 = vmatpush1.msra.mxu0 0.0
    %676 = vmatprep.subr.mxu0 0.0
    %677 = vmatpush1.msra.mxu0 0.0
    %678 = vmatprep.subr.mxu0 0.0
    %679 = vmatpush1.msra.mxu0 0.0
    %680 = vmatprep.subr.mxu0 0.0
    %681 = vmatpush1.msra.mxu0 0.0
    %682 = vmatprep.subr.mxu0 0.0
    %683 = vmatpush1.msra.mxu0 0.0
    %684 = vmatprep.subr.mxu0 0.0
    %685 = vmatpush1.msra.mxu0 0.0
    %686 = vmatprep.subr.mxu0 0.0
    %687 = vmatpush1.msra.mxu0 0.0
    %688 = vmatprep.subr.mxu0 0.0
    %689 = vmatpush1.msra.mxu0 0.0
    %690 = vmatprep.subr.mxu0 0.0
    %691 = vmatpush1.msra.mxu0 0.0
    %692 = vmatprep.subr.mxu0 0.0
    %693 = vmatpush1.msra.mxu0 0.0
    %694 = vmatprep.subr.mxu0 0.0
    %695 = vmatpush1.msra.mxu0 0.0
    %696 = vmatprep.subr.mxu0 0.0
    %697 = vmatpush1.msra.mxu0 0.0
    %698 = vmatprep.mubr.f32.mxu0 0.0
    %699 = vmatmul.mubr.f32.gmra.mrb[0].mxu0 %v632
    %v700 = vpop.f32.mrb[0].mxu0
    %v701 = vadd.f32 %v626, %v700
    %v702 = vpop.f32.mrb[0].mxu0
    %703 = vdwg.mxu0
    %vm704 = vcmask 320512
    %705 = vst.msk [vmem:[#allocation2] sm:$0x3] %vm704, %v701
    // Predicated region
    $region26: #{rnn_predictor.1} parent=1 // pred_check
      _
    $region27: #{rnn_predictor.1} parent=1 // pred_check_branch
      %707 = sbr.rel (0) target = $region29
    $region28: #{rnn_predictor.1} parent=1 // pred_region
      %s709 = ssub.s32 32, 32
      %710 = vsyncadd [#allocation3], %s709
      %s712 = sshll.u32 [#allocation2], 4
      %s713 = int_to_ptr.vmem [resolvable:$true] %s712
      %715 = dma.vmem_to_hbm [thread:$0]  %s713, 32, %s6, [#allocation3]
    $region29: #{rnn_predictor.1} parent=1 // pred_fallthru
      _
    // Predicated region
    $region30: #{rnn_predictor.1} parent=1 // pred_check
      _
    $region31: #{rnn_predictor.1} parent=1 // pred_check_branch
      %717 = sbr.rel (0) target = $region33
    $region32: #{rnn_predictor.1} parent=1 // pred_region
      %718 = dma.done [#allocation3], 32
    $region33: #{rnn_predictor.1} parent=1 // pred_fallthru
      _
    %719 = vsyncpa [#allocation3], 1

</llo_original>
